<compile_context>
chip_gen: v5e
topology: v5e:2x2
jax: 0.10.0
libtpu: 0.0.40
codegen_flags: <defaults>
</compile_context>

<pallas_src>
import functools
import math

import jax
import jax.numpy as jnp
from jax.experimental import pallas as pl
from jax.experimental.pallas import tpu as pltpu


def _round_up(x, m):
    return ((x + m - 1) // m) * m


def _cdiv(a, b):
    return (a + b - 1) // b


def _pad_axis(a, target, axis):
    pad = target - a.shape[axis]
    if pad == 0:
        return a
    widths = [(0, 0)] * a.ndim
    widths[axis] = (0, pad)
    return jnp.pad(a, widths)


def _has_bf16_vector_units():
    """bf16 VPU/EUP exist on v6e (Trillium) and later; not on v5e or older."""
    try:
        kind = jax.devices()[0].device_kind.lower()
    except Exception:
        return False
    if "tpu" not in kind:
        return False
    for old in ("v2", "v3", "v4", "v5"):
        if old in kind:
            return False
    return True


def _mlp_kernel(x_ref, w1_ref, b1_ref, w2_ref, b2_ref, o_ref, *, bf16_eltwise):
    # fc1 on the MXU: bf16 operands, f32 accumulation.  x may arrive as f32
    # (unpadded fast path) or bf16 (padded path); the cast is a no-op for bf16.
    h = jnp.dot(x_ref[...].astype(jnp.bfloat16), w1_ref[...],
                preferred_element_type=jnp.float32)
    # fc1 bias with the QuantumLayer weight already folded in (host side), f32.
    h = h + b1_ref[...]

    # QuantumLayer (RY(x) RY(w) |0>, <Z>) == cos(x + w); qw is in the bias.
    q = jnp.cos(h)

    # GELU, tanh form -> EUP slot.  bf16 on v6e/v7x, f32 on v5e.
    if bf16_eltwise:
        q = q.astype(jnp.bfloat16)
    a = jax.nn.gelu(q, approximate=True)

    # fc2 on the MXU: bf16 operands, f32 accumulation.
    y = jnp.dot(a.astype(jnp.bfloat16), w2_ref[...],
                preferred_element_type=jnp.float32)
    y = y + b2_ref[...]

    # Dropout(p=0.0) -> identity.
    o_ref[...] = y.astype(o_ref.dtype)


def mlp_forward(x, params, *, tm=1024, out_dtype=None, bf16_eltwise=None):
    """x: [B, T, in_feat] float32.  Returns [B, T, out_feat] in `out_dtype`
    (defaults to x.dtype; pass jnp.bfloat16 to halve output HBM writeback)."""
    w1, b1, qw, w2, b2 = (
        params["w1"], params["b1"], params["qw"], params["w2"], params["b2"]
    )
    B, T, in_feat = x.shape
    hid_feat = w1.shape[1]
    out_feat = w2.shape[1]
    M = B * T
    if out_dtype is None:
        out_dtype = x.dtype
    if bf16_eltwise is None:
        bf16_eltwise = _has_bf16_vector_units()

    # Lane-dense feature dims (multiples of 128).
    in_p = _round_up(in_feat, 128)
    hid_p = _round_up(hid_feat, 128)
    out_p = _round_up(out_feat, 128)

    # Row tile: as large as practical (per-step overhead ~0.35 us), but split so
    # v7x's two TensorCores both get a tile once there are >= 512 rows.
    TM = min(tm, _round_up(M, 8))
    if M >= 512:
        TM = min(TM, _round_up(_cdiv(M, 2), 256))
    M_p = _round_up(M, TM)
    n_m = M_p // TM

    # x: skip the wrapper-side pad/cast pass when no padding is needed (the
    # kernel casts f32 -> bf16 itself, saving a full HBM read+write of x).
    # When padding is required, pad AND cast so the in-kernel read is 2 B/elem.
    x2d = x.reshape(M, in_feat)
    if in_feat == in_p and M == M_p:
        x_in = x2d                                            # f32 pass-through
    else:
        x_in = _pad_axis(_pad_axis(x2d, M_p, 0), in_p, 1).astype(jnp.bfloat16)

    # Weights pre-cast to bf16 (f32 accumulate in-kernel); biases stay f32.
    w1p = _pad_axis(_pad_axis(w1, in_p, 0), hid_p, 1).astype(jnp.bfloat16)
    w2p = _pad_axis(_pad_axis(w2, hid_p, 0), out_p, 1).astype(jnp.bfloat16)
    # Fold the QuantumLayer weight into the fc1 bias (1 x hid vector add, host).
    b1p = _pad_axis((b1 + qw[0]).reshape(1, hid_feat), hid_p, 1)
    b2p = _pad_axis(b2.reshape(1, out_feat), out_p, 1)

    x_bytes = jnp.dtype(x_in.dtype).itemsize
    out_bytes = jnp.dtype(out_dtype).itemsize

    # Raise the scoped-VMEM limit when double-buffered x/out tiles + resident
    # weights + live f32 TM x hid temporaries approach v5e's 16 MiB default.
    vmem_est = (2 * TM * in_p * x_bytes                       # x tiles (dbuf)
                + 2 * TM * out_p * out_bytes                  # out tiles (dbuf)
                + 2 * (in_p * hid_p + hid_p * out_p) * 2      # bf16 weights (dbuf)
                + 2 * (hid_p + out_p) * 4                     # biases (dbuf)
                + 4 * TM * hid_p * 4)                         # f32 temporaries
    vmem_limit = None
    if vmem_est > (12 << 20):
        vmem_limit = int(min(64 << 20, max(32 << 20, (vmem_est * 3) // 2)))

    cost = pl.CostEstimate(
        flops=2 * M_p * (in_p * hid_p + hid_p * out_p),
        transcendentals=2 * M_p * hid_p,                      # cos + tanh per elem
        bytes_accessed=(M_p * in_p * x_bytes + in_p * hid_p * 2
                        + hid_p * out_p * 2 + hid_p * 4 + out_p * 4
                        + M_p * out_p * out_bytes),
    )

    kernel = functools.partial(_mlp_kernel, bf16_eltwise=bf16_eltwise)

    out = pl.pallas_call(
        kernel,
        out_shape=jax.ShapeDtypeStruct((M_p, out_p), out_dtype),
        grid_spec=pltpu.PrefetchScalarGridSpec(
            num_scalar_prefetch=0,
            grid=(n_m,),
            in_specs=[
                pl.BlockSpec((TM, in_p), lambda i: (i, 0)),       # x tile streams
                pl.BlockSpec((in_p, hid_p), lambda i: (0, 0)),    # w1 resident
                pl.BlockSpec((1, hid_p), lambda i: (0, 0)),       # b1 (+qw) resident
                pl.BlockSpec((hid_p, out_p), lambda i: (0, 0)),   # w2 resident
                pl.BlockSpec((1, out_p), lambda i: (0, 0)),       # b2 resident
            ],
            out_specs=pl.BlockSpec((TM, out_p), lambda i: (i, 0)),
        ),
        compiler_params=pltpu.CompilerParams(
            dimension_semantics=("parallel",),                    # v7x megacore
            vmem_limit_bytes=vmem_limit),
        cost_estimate=cost,
    )(x_in, w1p, b1p, w2p, b2p)

    return out[:M, :out_feat].reshape(B, T, out_feat)


def init_params(key, in_feat, hid_feat=None, out_feat=None):
    """Deterministic init mimicking nn.Linear's U(-1/sqrt(fan_in), 1/sqrt(fan_in))."""
    if not hid_feat:
        hid_feat = in_feat
    if not out_feat:
        out_feat = in_feat
    k1, k2, k3, k4, k5 = jax.random.split(key, 5)
    bound1 = 1.0 / math.sqrt(in_feat)
    bound2 = 1.0 / math.sqrt(hid_feat)
    return {
        # Stored already transposed to [in, out] for the kernel.
        "w1": jax.random.uniform(k1, (in_feat, hid_feat), jnp.float32, -bound1, bound1),
        "b1": jax.random.uniform(k2, (hid_feat,), jnp.float32, -bound1, bound1),
        # QuantumLayer weight, shape (1,).
        "qw": jax.random.uniform(k3, (1,), jnp.float32, -math.pi, math.pi),
        "w2": jax.random.uniform(k4, (hid_feat, out_feat), jnp.float32, -bound2, bound2),
        "b2": jax.random.uniform(k5, (out_feat,), jnp.float32, -bound2, bound2),
    }


def mlp_reference(x, params, *, bf16_eltwise=False):
    """Pure-JAX reference using the same numerics recipe as the kernel
    (bf16 matmuls, f32 accumulate, qw folded into the fc1 bias, tanh-GELU)."""
    h = (jnp.dot(x.astype(jnp.bfloat16), params["w1"].astype(jnp.bfloat16),
                 preferred_element_type=jnp.float32)
         + (params["b1"] + params["qw"][0]))
    q = jnp.cos(h)
    if bf16_eltwise:
        q = q.astype(jnp.bfloat16)
    a = jax.nn.gelu(q, approximate=True)
    y = jnp.dot(a.astype(jnp.bfloat16), params["w2"].astype(jnp.bfloat16),
                preferred_element_type=jnp.float32) + params["b2"]
    return y


if __name__ == "__main__":
    key = jax.random.PRNGKey(0)
    kx, kp = jax.random.split(key)

    B, T, in_feat = 2, 8, 32          # hid_feat = out_feat = in_feat (module defaults)
    x = jax.random.normal(kx, (B, T, in_feat), dtype=jnp.float32)
    params = init_params(kp, in_feat)

    bf16_eltwise = _has_bf16_vector_units()
    y = mlp_forward(x, params, bf16_eltwise=bf16_eltwise)
    jax.block_until_ready(y)

    y_ref = mlp_reference(x, params, bf16_eltwise=bf16_eltwise)
    assert y.shape == (B, T, in_feat)
    assert jnp.allclose(y, y_ref, atol=1e-2, rtol=1e-2), "mismatch vs reference"

    print("KERNEL_OK")
</pallas_src>

<mosaic_0001>
module attributes {stable_mosaic.version = 11 : i64} {
  func.func @_mlp_kernel(%arg0: i32, %arg1: memref<16x128xbf16, #tpu.memory_space<vmem>>, %arg2: memref<128x128xbf16, #tpu.memory_space<vmem>>, %arg3: memref<1x128xf32, #tpu.memory_space<vmem>>, %arg4: memref<128x128xbf16, #tpu.memory_space<vmem>>, %arg5: memref<1x128xf32, #tpu.memory_space<vmem>>, %arg6: memref<16x128xf32, #tpu.memory_space<vmem>>) attributes {dimension_semantics = [#tpu.dimension_semantics<parallel>], iteration_bounds = array<i64: 1>, scalar_prefetch = 0 : i64, scratch_operands = 0 : i64, tpu.core_type = #tpu.core_type<tc>, window_params = [{transform_indices = @transform_0, window_bounds = array<i64: 16, 128>}, {pipeline_mode = #tpu.pipeline_mode<synchronous>, transform_indices = @transform_1, window_bounds = array<i64: 128, 128>}, {pipeline_mode = #tpu.pipeline_mode<synchronous>, transform_indices = @transform_2, window_bounds = array<i64: 1, 128>}, {pipeline_mode = #tpu.pipeline_mode<synchronous>, transform_indices = @transform_3, window_bounds = array<i64: 128, 128>}, {pipeline_mode = #tpu.pipeline_mode<synchronous>, transform_indices = @transform_4, window_bounds = array<i64: 1, 128>}, {transform_indices = @transform_5, window_bounds = array<i64: 16, 128>}]} {
    %c0 = arith.constant 0 : index
    %c0_0 = arith.constant 0 : index
    %0 = vector.load %arg1[%c0, %c0_0] : memref<16x128xbf16, #tpu.memory_space<vmem>>, vector<16x128xbf16>
    %c0_1 = arith.constant 0 : index
    %c0_2 = arith.constant 0 : index
    %1 = vector.load %arg2[%c0_1, %c0_2] : memref<128x128xbf16, #tpu.memory_space<vmem>>, vector<128x128xbf16>
    %cst = arith.constant dense<0.000000e+00> : vector<16x128xf32>
    %2 = tpu.matmul %0, %1, %cst {dimension_numbers = #tpu.dot_dimension_numbers<[1], [0], [0], [1], [0, 0, 1, 1], [], []>} : vector<16x128xbf16>, vector<128x128xbf16>, vector<16x128xf32> -> vector<16x128xf32>
    %c0_3 = arith.constant 0 : index
    %c0_4 = arith.constant 0 : index
    %3 = vector.load %arg3[%c0_3, %c0_4] : memref<1x128xf32, #tpu.memory_space<vmem>>, vector<1x128xf32>
    %4 = vector.broadcast %3 : vector<1x128xf32> to vector<16x128xf32>
    %5 = arith.addf %2, %4 : vector<16x128xf32>
    %6 = math.cos %5 : vector<16x128xf32>
    %7 = arith.mulf %6, %6 : vector<16x128xf32>
    %8 = arith.mulf %6, %7 : vector<16x128xf32>
    %cst_5 = arith.constant 4.471500e-02 : f32
    %9 = vector.broadcast %cst_5 : f32 to vector<16x128xf32>
    %10 = arith.mulf %9, %8 : vector<16x128xf32>
    %11 = arith.addf %6, %10 : vector<16x128xf32>
    %cst_6 = arith.constant 0.797884583 : f32
    %12 = vector.broadcast %cst_6 : f32 to vector<16x128xf32>
    %13 = arith.mulf %12, %11 : vector<16x128xf32>
    %14 = math.tanh %13 : vector<16x128xf32>
    %cst_7 = arith.constant 1.000000e+00 : f32
    %15 = vector.broadcast %cst_7 : f32 to vector<16x128xf32>
    %16 = arith.addf %15, %14 : vector<16x128xf32>
    %cst_8 = arith.constant 5.000000e-01 : f32
    %17 = vector.broadcast %cst_8 : f32 to vector<16x128xf32>
    %18 = arith.mulf %17, %16 : vector<16x128xf32>
    %19 = arith.mulf %6, %18 : vector<16x128xf32>
    %20 = arith.truncf %19 : vector<16x128xf32> to vector<16x128xbf16>
    %c0_9 = arith.constant 0 : index
    %c0_10 = arith.constant 0 : index
    %21 = vector.load %arg4[%c0_9, %c0_10] : memref<128x128xbf16, #tpu.memory_space<vmem>>, vector<128x128xbf16>
    %cst_11 = arith.constant dense<0.000000e+00> : vector<16x128xf32>
    %22 = tpu.matmul %20, %21, %cst_11 {dimension_numbers = #tpu.dot_dimension_numbers<[1], [0], [0], [1], [0, 0, 1, 1], [], []>} : vector<16x128xbf16>, vector<128x128xbf16>, vector<16x128xf32> -> vector<16x128xf32>
    %c0_12 = arith.constant 0 : index
    %c0_13 = arith.constant 0 : index
    %23 = vector.load %arg5[%c0_12, %c0_13] : memref<1x128xf32, #tpu.memory_space<vmem>>, vector<1x128xf32>
    %24 = vector.broadcast %23 : vector<1x128xf32> to vector<16x128xf32>
    %25 = arith.addf %22, %24 : vector<16x128xf32>
    %c0_14 = arith.constant 0 : index
    %c0_15 = arith.constant 0 : index
    %26 = vector.load %arg6[%c0_14, %c0_15] : memref<16x128xf32, #tpu.memory_space<vmem>>, vector<16x128xf32>
    tpu.vector_store %arg6[%c0_14, %c0_15], %25 {strides = array<i32>} : memref<16x128xf32, #tpu.memory_space<vmem>>, vector<16x128xf32>,
    return
  }
  func.func @transform_0(%arg0: i32) -> (i32, i32) {
    %c0_i32 = arith.constant 0 : i32
    %c0_i32_0 = arith.constant 0 : i32
    return %arg0, %c0_i32 : i32, i32
  }
  func.func @transform_1(%arg0: i32) -> (i32, i32) {
    %c0_i32 = arith.constant 0 : i32
    %c0_i32_0 = arith.constant 0 : i32
    %c0_i32_1 = arith.constant 0 : i32
    return %c0_i32, %c0_i32_0 : i32, i32
  }
  func.func @transform_2(%arg0: i32) -> (i32, i32) {
    %c0_i32 = arith.constant 0 : i32
    %c0_i32_0 = arith.constant 0 : i32
    %c0_i32_1 = arith.constant 0 : i32
    return %c0_i32, %c0_i32_0 : i32, i32
  }
  func.func @transform_3(%arg0: i32) -> (i32, i32) {
    %c0_i32 = arith.constant 0 : i32
    %c0_i32_0 = arith.constant 0 : i32
    %c0_i32_1 = arith.constant 0 : i32
    return %c0_i32, %c0_i32_0 : i32, i32
  }
  func.func @transform_4(%arg0: i32) -> (i32, i32) {
    %c0_i32 = arith.constant 0 : i32
    %c0_i32_0 = arith.constant 0 : i32
    %c0_i32_1 = arith.constant 0 : i32
    return %c0_i32, %c0_i32_0 : i32, i32
  }
  func.func @transform_5(%arg0: i32) -> (i32, i32) {
    %c0_i32 = arith.constant 0 : i32
    %c0_i32_0 = arith.constant 0 : i32
    return %arg0, %c0_i32 : i32, i32
  }
}

</mosaic_0001>

<llo_original>
// kernel: tpu_custom_call.1
$region0: #{tpu_custom_call.1}
  #allocation0 [shape = 'u32[]', space=smem, size = 0x4, offset = 0x4, fixed_abs, tag = 'smem constant byte address 0x4 - core index']
  #allocation1 [shape = 'u32[72,128]{1,0:T(1,128)}', space=vmem, size = 0x9000, scoped, tag = 'internal scratch']
  %s0 = inlined_call_operand.hbm [shape: bf16[16,128], index: 0, kind: input, shape index: {}]
  %s1 = inlined_call_operand.hbm [shape: bf16[128,128], index: 1, kind: input, shape index: {}]
  %s2 = inlined_call_operand.vmem [shape: f32[1,128], index: 2, kind: input, shape index: {}]
  %s3 = inlined_call_operand.hbm [shape: bf16[128,128], index: 3, kind: input, shape index: {}]
  %s4 = inlined_call_operand.vmem [shape: f32[1,128], index: 4, kind: input, shape index: {}]
  %s5 = inlined_call_operand.hbm [shape: f32[16,128], index: 5, kind: output, shape index: {}]
  %s6 = sld [smem:[#allocation0]]
  $region42: #{tpu_custom_call.1} parent=0
    _
  %s8 = ssub.s32 1, %s6
  %s9 = scalar_select 0, %s8, %s6
  $region1: #{tpu_custom_call.1} parent=0
    #allocation2 [shape = 'u8[4096]{0}', space=vmem, size = 0x1000, scoped, tag = 'input window, operand 0, single buffered']
    #allocation3 [shape = 's32[1]{0}', space=sflag, size = 0x4, scoped, tag = 'scoped memory for tpu_custom_call.1']
    #allocation4 [shape = 's32[1]{0}', space=sflag, size = 0x4, scoped, tag = 'scoped memory for tpu_custom_call.1']
    #allocation5 [shape = 'u8[32768]{0}', space=vmem, size = 0x8000, scoped, tag = 'input window, operand 1, single buffered']
    #allocation6 [shape = 's32[1]{0}', space=sflag, size = 0x4, scoped, tag = 'scoped memory for tpu_custom_call.1']
    #allocation7 [shape = 'u8[32768]{0}', space=vmem, size = 0x8000, scoped, tag = 'input window, operand 3, single buffered']
    #allocation8 [shape = 'u8[8192]{0}', space=vmem, size = 0x2000, scoped, tag = 'output window, operand 0, single buffered']
    %10 = vsyncpa [#allocation3], 0
    %11 = vsyncpa [#allocation6], 0
    %12 = vsyncpa [#allocation4], 0
    // Predicated region
    $region2: #{tpu_custom_call.1} parent=1 // pred_check
      _
    $region3: #{tpu_custom_call.1} parent=1 // pred_check_branch
      %14 = sbr.rel (0) target = $region5
    $region4: #{tpu_custom_call.1} parent=1 // pred_region
      %16 = vsyncadd [#allocation3], 0
      %s17 = sshll.u32 %s0, 4
      %s18 = int_to_ptr.hbm [resolvable:$true] %s17
      %s19 = sshll.u32 [#allocation2], 4
      %s20 = int_to_ptr.vmem [resolvable:$true] %s19
      %25 = dma.hbm_to_vmem [thread:$0]  %s18, 128, %s20, [#allocation3], 64, 64, 4
    $region5: #{tpu_custom_call.1} parent=1 // pred_fallthru
      _
    // Predicated region
    $region6: #{tpu_custom_call.1} parent=1 // pred_check
      _
    $region7: #{tpu_custom_call.1} parent=1 // pred_check_branch
      %27 = sbr.rel (0) target = $region9
    $region8: #{tpu_custom_call.1} parent=1 // pred_region
      %29 = vsyncadd [#allocation6], 0
      %s30 = sshll.u32 %s1, 4
      %s31 = int_to_ptr.hbm [resolvable:$true] %s30
      %s32 = sshll.u32 [#allocation5], 4
      %s33 = int_to_ptr.vmem [resolvable:$true] %s32
      %38 = dma.hbm_to_vmem [thread:$0]  %s31, 1024, %s33, [#allocation6], 64, 64, 4
    $region9: #{tpu_custom_call.1} parent=1 // pred_fallthru
      _
    // Predicated region
    $region10: #{tpu_custom_call.1} parent=1 // pred_check
      _
    $region11: #{tpu_custom_call.1} parent=1 // pred_check_branch
      %40 = sbr.rel (0) target = $region13
    $region12: #{tpu_custom_call.1} parent=1 // pred_region
      _
    $region13: #{tpu_custom_call.1} parent=1 // pred_fallthru
      _
    // Predicated region
    $region14: #{tpu_custom_call.1} parent=1 // pred_check
      _
    $region15: #{tpu_custom_call.1} parent=1 // pred_check_branch
      %42 = sbr.rel (0) target = $region17
    $region16: #{tpu_custom_call.1} parent=1 // pred_region
      %44 = vsyncadd [#allocation6], 0
      %s45 = sshll.u32 %s3, 4
      %s46 = int_to_ptr.hbm [resolvable:$true] %s45
      %s47 = sshll.u32 [#allocation7], 4
      %s48 = int_to_ptr.vmem [resolvable:$true] %s47
      %53 = dma.hbm_to_vmem [thread:$0]  %s46, 1024, %s48, [#allocation6], 64, 64, 4
    $region17: #{tpu_custom_call.1} parent=1 // pred_fallthru
      _
    // Predicated region
    $region18: #{tpu_custom_call.1} parent=1 // pred_check
      _
    $region19: #{tpu_custom_call.1} parent=1 // pred_check_branch
      %55 = sbr.rel (0) target = $region21
    $region20: #{tpu_custom_call.1} parent=1 // pred_region
      _
    $region21: #{tpu_custom_call.1} parent=1 // pred_fallthru
      _
    // Predicated region
    $region22: #{tpu_custom_call.1} parent=1 // pred_check
      _
    $region23: #{tpu_custom_call.1} parent=1 // pred_check_branch
      %57 = sbr.rel (0) target = $region25
    $region24: #{tpu_custom_call.1} parent=1 // pred_region
      %59 = dma.done [#allocation3], 128
    $region25: #{tpu_custom_call.1} parent=1 // pred_fallthru
      _
    // Predicated region
    $region26: #{tpu_custom_call.1} parent=1 // pred_check
      _
    $region27: #{tpu_custom_call.1} parent=1 // pred_check_branch
      %61 = sbr.rel (0) target = $region29
    $region28: #{tpu_custom_call.1} parent=1 // pred_region
      %63 = dma.done [#allocation6], 1024
    $region29: #{tpu_custom_call.1} parent=1 // pred_fallthru
      _
    // Predicated region
    $region30: #{tpu_custom_call.1} parent=1 // pred_check
      _
    $region31: #{tpu_custom_call.1} parent=1 // pred_check_branch
      %65 = sbr.rel (0) target = $region33
    $region32: #{tpu_custom_call.1} parent=1 // pred_region
      %67 = dma.done [#allocation6], 1024
    $region33: #{tpu_custom_call.1} parent=1 // pred_fallthru
      _
    %v68 = vld [vmem:[#allocation2] sm:$0xf]
    %v69 = vld [vmem:[#allocation2 + $0x4] sm:$0xf]
    %v70 = vld [vmem:[#allocation5] sm:$0xf]
    %v71 = vld [vmem:[#allocation5 + $0x4] sm:$0xf]
    %v72 = vld [vmem:[#allocation5 + $0x8] sm:$0xf]
    %v73 = vld [vmem:[#allocation5 + $0xc] sm:$0xf]
    %v74 = vld [vmem:[#allocation5 + $0x10] sm:$0xf]
    %v75 = vld [vmem:[#allocation5 + $0x14] sm:$0xf]
    %v76 = vld [vmem:[#allocation5 + $0x18] sm:$0xf]
    %v77 = vld [vmem:[#allocation5 + $0x1c] sm:$0xf]
    %v78 = vld [vmem:[#allocation5 + $0x20] sm:$0xf]
    %v79 = vld [vmem:[#allocation5 + $0x24] sm:$0xf]
    %v80 = vld [vmem:[#allocation5 + $0x28] sm:$0xf]
    %v81 = vld [vmem:[#allocation5 + $0x2c] sm:$0xf]
    %v82 = vld [vmem:[#allocation5 + $0x30] sm:$0xf]
    %v83 = vld [vmem:[#allocation5 + $0x34] sm:$0xf]
    %v84 = vld [vmem:[#allocation5 + $0x38] sm:$0xf]
    %v85 = vld [vmem:[#allocation5 + $0x3c] sm:$0xf]
    %v86 = vld [vmem:[%s2] sm:$0x1]
    %v88 = vperm.slane %v86, 0
    %v92 = vunpack.c.l.b16 %v68
    %v93 = vunpack.c.l.b16 %v69
    %v94 = vpack.c.b16 %v93, %v92
    %v112 = vunpack.c.l.b16 %v70
    %v113 = vunpack.c.l.b16 %v71
    %v114 = vunpack.c.l.b16 %v72
    %v115 = vunpack.c.l.b16 %v73
    %v116 = vunpack.c.l.b16 %v74
    %v117 = vunpack.c.l.b16 %v75
    %v118 = vunpack.c.l.b16 %v76
    %v119 = vunpack.c.l.b16 %v77
    %v120 = vunpack.c.l.b16 %v78
    %v121 = vunpack.c.l.b16 %v79
    %v122 = vunpack.c.l.b16 %v80
    %v123 = vunpack.c.l.b16 %v81
    %v124 = vunpack.c.l.b16 %v82
    %v125 = vunpack.c.l.b16 %v83
    %v126 = vunpack.c.l.b16 %v84
    %v127 = vunpack.c.l.b16 %v85
    %v128 = vpack.c.b16 %v113, %v112
    %v129 = vpack.c.b16 %v115, %v114
    %v130 = vpack.c.b16 %v117, %v116
    %v131 = vpack.c.b16 %v119, %v118
    %v132 = vpack.c.b16 %v121, %v120
    %v133 = vpack.c.b16 %v123, %v122
    %v134 = vpack.c.b16 %v125, %v124
    %v135 = vpack.c.b16 %v127, %v126
    %144 = vmatpush.bf16.msra.mxu0 %v135
    %145 = vmatpush.bf16.msra.mxu0 %v134
    %146 = vmatpush.bf16.msra.mxu0 %v133
    %147 = vmatpush.bf16.msra.mxu0 %v132
    %148 = vmatpush.bf16.msra.mxu0 %v131
    %149 = vmatpush.bf16.msra.mxu0 %v130
    %150 = vmatpush.bf16.msra.mxu0 %v129
    %151 = vmatpush.bf16.msra.mxu0 %v128
    %152 = vmatmul.bf16.gmra.mxu0 %v94
    %v153 = vpop.f32.mrf.mxu0
    %v154 = vadd.f32 %v88, %v153
    %v155 = vpop.f32.mrf.mxu0
    %v156 = vadd.f32 %v88, %v155
    %157 = vdwg.mxu0
    %v158 = vand.u32 2147483647, %v154
    %vm159 = vcmp.le.f32.partialorder %v158, 0.7853982
    %vm160 = vcmp.lt.s32.totalorder %v154, 0
    %v161 = vand.u32 %v154, 2139095040
    %v162 = vshrl.u32 %v161, 23
    %v163 = vsub.s32 %v162, 127
    %v164 = vand.u32 2147483647, %v154
    %v165 = vand.u32 %v164, 8388607
    %v166 = vor.u32 %v165, 8388608
    %v167 = vsub.s32 0, %v166
    %v168 = vadd.s32 %v163, 1
    %vm169 = vcmp.gt.s32.totalorder %v168, 0
    %v170 = vsel %vm169, %v168, 0
    %v171 = vshrl.u32 %v170, 5
    %v172 = vand.u32 %v170, 31
    %v173 = vsub.s32 32, %v172
    %v174 = vshrl.u32 683565275, %v173
    %v175 = vshll.u32 683565275, %v172
    %v176 = vshrl.u32 2475754826, %v173
    %v177 = vor.u32 %v175, %v176
    %v178 = vshll.u32 2475754826, %v172
    %v179 = vshrl.u32 2131351028, %v173
    %v180 = vor.u32 %v178, %v179
    %v181 = vshll.u32 2131351028, %v172
    %v182 = vshrl.u32 2102212464, %v173
    %v183 = vor.u32 %v181, %v182
    %v184 = vshll.u32 2102212464, %v172
    %v185 = vshrl.u32 920167782, %v173
    %v186 = vor.u32 %v184, %v185
    %v187 = vshll.u32 920167782, %v172
    %v188 = vshrl.u32 1326507024, %v173
    %v189 = vor.u32 %v187, %v188
    %vm190 = vcmp.lt.s32.totalorder %v171, 1
    %vm191 = vcmp.lt.s32.totalorder %v171, 2
    %vm192 = vcmp.lt.s32.totalorder %v171, 3
    %vm193 = vcmp.lt.s32.totalorder %v171, 4
    %v194 = vsel %vm190, %v174, %v177
    %v195 = vsel %vm193, %v183, 2102212464
    %v196 = vsel %vm192, %v180, %v195
    %v197 = vsel %vm191, %v194, %v196
    %v198 = vsel %vm190, %v177, %v180
    %v199 = vsel %vm193, %v186, 920167782
    %v200 = vsel %vm192, %v183, %v199
    %v201 = vsel %vm191, %v198, %v200
    %v202 = vsel %vm190, %v180, %v183
    %v203 = vsel %vm193, %v189, 1326507024
    %v204 = vsel %vm192, %v186, %v203
    %v205 = vsel %vm191, %v202, %v204
    %v206 = vshll.u32 %v166, 8
    %v207 = vand.u32 %v206, 65535
    %v208 = vshrl.u32 %v206, 16
    %v209 = vand.u32 %v205, 65535
    %v210 = vshrl.u32 %v205, 16
    %v211 = vmul.u32 %v207, %v209
    %v212 = vmul.u32 %v207, %v210
    %v213 = vmul.u32 %v208, %v209
    %v214 = vmul.u32 %v208, %v210
    %v215 = vshll.u32 %v212, 16
    %v216 = vshrl.u32 %v212, 16
    %v217 = vshll.u32 %v213, 16
    %v218 = vshrl.u32 %v213, 16
    %vm219 = vc.u32 %v211, %v215
    %v220 = vsel %vm219, 1, 0
    %v221 = vadd.s32 %v211, %v215
    %v222 = vadd.s32 %v214, %v220
    %vm223 = vc.u32 %v221, %v217
    %v224 = vsel %vm223, 1, 0
    %v225 = vadd.s32 %v221, %v217
    %v226 = vadd.s32 %v222, %v224
    %v227 = vadd.s32 %v226, %v216
    %v228 = vadd.s32 %v227, %v218
    %v229 = vand.u32 %v206, 65535
    %v230 = vshrl.u32 %v206, 16
    %v231 = vand.u32 %v201, 65535
    %v232 = vshrl.u32 %v201, 16
    %v233 = vmul.u32 %v229, %v231
    %v234 = vmul.u32 %v229, %v232
    %v235 = vmul.u32 %v230, %v231
    %v236 = vmul.u32 %v230, %v232
    %v237 = vshll.u32 %v234, 16
    %v238 = vshrl.u32 %v234, 16
    %v239 = vshll.u32 %v235, 16
    %v240 = vshrl.u32 %v235, 16
    %vm241 = vc.u32 %v233, %v237
    %v242 = vsel %vm241, 1, 0
    %v243 = vadd.s32 %v233, %v237
    %v244 = vadd.s32 %v236, %v242
    %vm245 = vc.u32 %v243, %v239
    %v246 = vsel %vm245, 1, 0
    %v247 = vadd.s32 %v243, %v239
    %v248 = vadd.s32 %v244, %v246
    %v249 = vadd.s32 %v248, %v238
    %v250 = vadd.s32 %v249, %v240
    %v251 = vmul.u32 %v206, %v197
    %v252 = vadd.s32 %v228, %v247
    %vm253 = vc.u32 %v228, %v247
    %v254 = vadd.s32 %v250, 1
    %v255 = vsel %vm253, %v254, %v250
    %v256 = vadd.s32 %v251, %v255
    %v257 = vadd.s32 %v256, 536870912
    %v258 = vshrl.u32 %v257, 30
    %v259 = vshll.u32 %v258, 30
    %v260 = vsub.s32 %v256, %v259
    %vm261 = vcmp.lt.s32.totalorder %v260, 0
    %v262 = vsub.s32 0, %v260
    %v263 = vsel %vm261, %v262, %v260
    %v264 = vclz %v263
    %v265 = vsub.s32 %v264, 2
    %vm266 = vcmp.gt.s32.totalorder 0, %v265
    %v267 = vsel %vm266, 0, %v265
    %v268 = vsub.s32 32, %v267
    %v269 = vshll.u32 %v260, %v267
    %v270 = vshrl.u32 %v252, %v268
    %v271 = vor.u32 %v269, %v270
    %v272 = vsub.s32 4294967266, %v267
    %v273 = vadd.s32 %v272, 127
    %v274 = vshll.u32 %v273, 23
    %v275 = vor.u32 4788187, %v274
    %v276 = vand.u32 2147483647, %v275
    %v278 = vcvt.s32.f32 %v271
    %v279 = vmul.f32 %v278, %v276
    %v280 = vxor.u32 %v279, 2147483648
    %v281 = vsel %vm160, %v280, %v279
    %v282 = vsub.s32 4, %v258
    %v283 = vsel %vm160, %v282, %v258
    %v284 = vsel %vm159, %v154, %v281
    %v285 = vsel %vm159, 0, %v283
    %v286 = vmul.f32 %v284, %v284
    %v287 = vmul.f32 %v286, -0.001358992
    %v288 = vadd.f32 %v287, 0.041655596
    %v289 = vmul.f32 %v286, %v288
    %v290 = vadd.f32 %v289, -0.4999988
    %v291 = vmul.f32 %v286, %v290
    %v292 = vadd.f32 1.0, %v291
    %v293 = vmul.f32 %v284, %v284
    %v294 = vmul.f32 %v293, -0.00019511016
    %v295 = vadd.f32 %v294, 0.008332121
    %v296 = vmul.f32 %v293, %v295
    %v297 = vadd.f32 %v296, -0.16666654
    %v298 = vmul.f32 %v293, %v297
    %v299 = vadd.f32 %v298, 1.0
    %v300 = vmul.f32 %v299, %v284
    %vm301 = vweird.f32 %v154
    %v302 = vand.u32 %v285, 3
    %vm303 = vcmp.lt.s32.totalorder %v302, 2
    %vm304 = vcmp.eq.s32.totalorder %v302, 0
    %v305 = vxor.u32 %v300, 2147483648
    %v306 = vsel %vm304, %v292, %v305
    %vm307 = vcmp.eq.s32.totalorder %v302, 2
    %v308 = vxor.u32 %v292, 2147483648
    %v309 = vsel %vm307, %v308, %v300
    %v310 = vsel %vm303, %v306, %v309
    %v311 = vsel %vm301, nan, %v310
    %v312 = vand.u32 2147483647, %v156
    %vm313 = vcmp.le.f32.partialorder %v312, 0.7853982
    %vm314 = vcmp.lt.s32.totalorder %v156, 0
    %v315 = vand.u32 %v156, 2139095040
    %v316 = vshrl.u32 %v315, 23
    %v317 = vsub.s32 %v316, 127
    %v318 = vand.u32 2147483647, %v156
    %v319 = vand.u32 %v318, 8388607
    %v320 = vor.u32 %v319, 8388608
    %v321 = vsub.s32 0, %v320
    %v322 = vadd.s32 %v317, 1
    %vm323 = vcmp.gt.s32.totalorder %v322, 0
    %v324 = vsel %vm323, %v322, 0
    %v325 = vshrl.u32 %v324, 5
    %v326 = vand.u32 %v324, 31
    %v327 = vsub.s32 32, %v326
    %v328 = vshrl.u32 683565275, %v327
    %v329 = vshll.u32 683565275, %v326
    %v330 = vshrl.u32 2475754826, %v327
    %v331 = vor.u32 %v329, %v330
    %v332 = vshll.u32 2475754826, %v326
    %v333 = vshrl.u32 2131351028, %v327
    %v334 = vor.u32 %v332, %v333
    %v335 = vshll.u32 2131351028, %v326
    %v336 = vshrl.u32 2102212464, %v327
    %v337 = vor.u32 %v335, %v336
    %v338 = vshll.u32 2102212464, %v326
    %v339 = vshrl.u32 920167782, %v327
    %v340 = vor.u32 %v338, %v339
    %v341 = vshll.u32 920167782, %v326
    %v342 = vshrl.u32 1326507024, %v327
    %v343 = vor.u32 %v341, %v342
    %vm344 = vcmp.lt.s32.totalorder %v325, 1
    %vm345 = vcmp.lt.s32.totalorder %v325, 2
    %vm346 = vcmp.lt.s32.totalorder %v325, 3
    %vm347 = vcmp.lt.s32.totalorder %v325, 4
    %v348 = vsel %vm344, %v328, %v331
    %v349 = vsel %vm347, %v337, 2102212464
    %v350 = vsel %vm346, %v334, %v349
    %v351 = vsel %vm345, %v348, %v350
    %v352 = vsel %vm344, %v331, %v334
    %v353 = vsel %vm347, %v340, 920167782
    %v354 = vsel %vm346, %v337, %v353
    %v355 = vsel %vm345, %v352, %v354
    %v356 = vsel %vm344, %v334, %v337
    %v357 = vsel %vm347, %v343, 1326507024
    %v358 = vsel %vm346, %v340, %v357
    %v359 = vsel %vm345, %v356, %v358
    %v360 = vshll.u32 %v320, 8
    %v361 = vand.u32 %v360, 65535
    %v362 = vshrl.u32 %v360, 16
    %v363 = vand.u32 %v359, 65535
    %v364 = vshrl.u32 %v359, 16
    %v365 = vmul.u32 %v361, %v363
    %v366 = vmul.u32 %v361, %v364
    %v367 = vmul.u32 %v362, %v363
    %v368 = vmul.u32 %v362, %v364
    %v369 = vshll.u32 %v366, 16
    %v370 = vshrl.u32 %v366, 16
    %v371 = vshll.u32 %v367, 16
    %v372 = vshrl.u32 %v367, 16
    %vm373 = vc.u32 %v365, %v369
    %v374 = vsel %vm373, 1, 0
    %v375 = vadd.s32 %v365, %v369
    %v376 = vadd.s32 %v368, %v374
    %vm377 = vc.u32 %v375, %v371
    %v378 = vsel %vm377, 1, 0
    %v379 = vadd.s32 %v375, %v371
    %v380 = vadd.s32 %v376, %v378
    %v381 = vadd.s32 %v380, %v370
    %v382 = vadd.s32 %v381, %v372
    %v383 = vand.u32 %v360, 65535
    %v384 = vshrl.u32 %v360, 16
    %v385 = vand.u32 %v355, 65535
    %v386 = vshrl.u32 %v355, 16
    %v387 = vmul.u32 %v383, %v385
    %v388 = vmul.u32 %v383, %v386
    %v389 = vmul.u32 %v384, %v385
    %v390 = vmul.u32 %v384, %v386
    %v391 = vshll.u32 %v388, 16
    %v392 = vshrl.u32 %v388, 16
    %v393 = vshll.u32 %v389, 16
    %v394 = vshrl.u32 %v389, 16
    %vm395 = vc.u32 %v387, %v391
    %v396 = vsel %vm395, 1, 0
    %v397 = vadd.s32 %v387, %v391
    %v398 = vadd.s32 %v390, %v396
    %vm399 = vc.u32 %v397, %v393
    %v400 = vsel %vm399, 1, 0
    %v401 = vadd.s32 %v397, %v393
    %v402 = vadd.s32 %v398, %v400
    %v403 = vadd.s32 %v402, %v392
    %v404 = vadd.s32 %v403, %v394
    %v405 = vmul.u32 %v360, %v351
    %v406 = vadd.s32 %v382, %v401
    %vm407 = vc.u32 %v382, %v401
    %v408 = vadd.s32 %v404, 1
    %v409 = vsel %vm407, %v408, %v404
    %v410 = vadd.s32 %v405, %v409
    %v411 = vadd.s32 %v410, 536870912
    %v412 = vshrl.u32 %v411, 30
    %v413 = vshll.u32 %v412, 30
    %v414 = vsub.s32 %v410, %v413
    %vm415 = vcmp.lt.s32.totalorder %v414, 0
    %v416 = vsub.s32 0, %v414
    %v417 = vsel %vm415, %v416, %v414
    %v418 = vclz %v417
    %v419 = vsub.s32 %v418, 2
    %vm420 = vcmp.gt.s32.totalorder 0, %v419
    %v421 = vsel %vm420, 0, %v419
    %v422 = vsub.s32 32, %v421
    %v423 = vshll.u32 %v414, %v421
    %v424 = vshrl.u32 %v406, %v422
    %v425 = vor.u32 %v423, %v424
    %v426 = vsub.s32 4294967266, %v421
    %v427 = vadd.s32 %v426, 127
    %v428 = vshll.u32 %v427, 23
    %v429 = vor.u32 4788187, %v428
    %v430 = vand.u32 2147483647, %v429
    %v432 = vcvt.s32.f32 %v425
    %v433 = vmul.f32 %v432, %v430
    %v434 = vxor.u32 %v433, 2147483648
    %v435 = vsel %vm314, %v434, %v433
    %v436 = vsub.s32 4, %v412
    %v437 = vsel %vm314, %v436, %v412
    %v438 = vsel %vm313, %v156, %v435
    %v439 = vsel %vm313, 0, %v437
    %v440 = vmul.f32 %v438, %v438
    %v441 = vmul.f32 %v440, -0.001358992
    %v442 = vadd.f32 %v441, 0.041655596
    %v443 = vmul.f32 %v440, %v442
    %v444 = vadd.f32 %v443, -0.4999988
    %v445 = vmul.f32 %v440, %v444
    %v446 = vadd.f32 1.0, %v445
    %v447 = vmul.f32 %v438, %v438
    %v448 = vmul.f32 %v447, -0.00019511016
    %v449 = vadd.f32 %v448, 0.008332121
    %v450 = vmul.f32 %v447, %v449
    %v451 = vadd.f32 %v450, -0.16666654
    %v452 = vmul.f32 %v447, %v451
    %v453 = vadd.f32 %v452, 1.0
    %v454 = vmul.f32 %v453, %v438
    %vm455 = vweird.f32 %v156
    %v456 = vand.u32 %v439, 3
    %vm457 = vcmp.lt.s32.totalorder %v456, 2
    %vm458 = vcmp.eq.s32.totalorder %v456, 0
    %v459 = vxor.u32 %v454, 2147483648
    %v460 = vsel %vm458, %v446, %v459
    %vm461 = vcmp.eq.s32.totalorder %v456, 2
    %v462 = vxor.u32 %v446, 2147483648
    %v463 = vsel %vm461, %v462, %v454
    %v464 = vsel %vm457, %v460, %v463
    %v465 = vsel %vm455, nan, %v464
    %v466 = vmul.f32 %v311, %v311
    %v467 = vmul.f32 %v465, %v465
    %v468 = vmul.f32 %v311, %v466
    %v469 = vmul.f32 %v465, %v467
    %v470 = vmul.f32 %v468, 0.044715
    %v471 = vmul.f32 %v469, 0.044715
    %v472 = vadd.f32 %v311, %v470
    %v473 = vadd.f32 %v465, %v471
    %v474 = vmul.f32 %v472, 0.7978846
    %v475 = vmul.f32 %v473, 0.7978846
    %v476 = vtanh.pop %v474
    %v477 = vtanh.pop %v475
    %v478 = vadd.f32 %v476, 1.0
    %v479 = vadd.f32 %v477, 1.0
    %v480 = vmul.f32 %v478, 0.5
    %v481 = vmul.f32 %v479, 0.5
    %v482 = vmul.f32 %v311, %v480
    %v483 = vmul.f32 %v465, %v481
    %v484 = vpack.c.bf16 %v483, %v482
    %v485 = vld [vmem:[#allocation7] sm:$0xf]
    %v486 = vld [vmem:[#allocation7 + $0x4] sm:$0xf]
    %v487 = vld [vmem:[#allocation7 + $0x8] sm:$0xf]
    %v488 = vld [vmem:[#allocation7 + $0xc] sm:$0xf]
    %v489 = vld [vmem:[#allocation7 + $0x10] sm:$0xf]
    %v490 = vld [vmem:[#allocation7 + $0x14] sm:$0xf]
    %v491 = vld [vmem:[#allocation7 + $0x18] sm:$0xf]
    %v492 = vld [vmem:[#allocation7 + $0x1c] sm:$0xf]
    %v493 = vld [vmem:[#allocation7 + $0x20] sm:$0xf]
    %v494 = vld [vmem:[#allocation7 + $0x24] sm:$0xf]
    %v495 = vld [vmem:[#allocation7 + $0x28] sm:$0xf]
    %v496 = vld [vmem:[#allocation7 + $0x2c] sm:$0xf]
    %v497 = vld [vmem:[#allocation7 + $0x30] sm:$0xf]
    %v498 = vld [vmem:[#allocation7 + $0x34] sm:$0xf]
    %v499 = vld [vmem:[#allocation7 + $0x38] sm:$0xf]
    %v500 = vld [vmem:[#allocation7 + $0x3c] sm:$0xf]
    %v501 = vld [vmem:[%s4] sm:$0x1]
    %v503 = vperm.slane %v501, 0
    %v521 = vunpack.c.l.b16 %v485
    %v522 = vunpack.c.l.b16 %v486
    %v523 = vunpack.c.l.b16 %v487
    %v524 = vunpack.c.l.b16 %v488
    %v525 = vunpack.c.l.b16 %v489
    %v526 = vunpack.c.l.b16 %v490
    %v527 = vunpack.c.l.b16 %v491
    %v528 = vunpack.c.l.b16 %v492
    %v529 = vunpack.c.l.b16 %v493
    %v530 = vunpack.c.l.b16 %v494
    %v531 = vunpack.c.l.b16 %v495
    %v532 = vunpack.c.l.b16 %v496
    %v533 = vunpack.c.l.b16 %v497
    %v534 = vunpack.c.l.b16 %v498
    %v535 = vunpack.c.l.b16 %v499
    %v536 = vunpack.c.l.b16 %v500
    %v537 = vpack.c.b16 %v522, %v521
    %v538 = vpack.c.b16 %v524, %v523
    %v539 = vpack.c.b16 %v526, %v525
    %v540 = vpack.c.b16 %v528, %v527
    %v541 = vpack.c.b16 %v530, %v529
    %v542 = vpack.c.b16 %v532, %v531
    %v543 = vpack.c.b16 %v534, %v533
    %v544 = vpack.c.b16 %v536, %v535
    %553 = vmatpush.bf16.msra.mxu0 %v544
    %554 = vmatpush.bf16.msra.mxu0 %v543
    %555 = vmatpush.bf16.msra.mxu0 %v542
    %556 = vmatpush.bf16.msra.mxu0 %v541
    %557 = vmatpush.bf16.msra.mxu0 %v540
    %558 = vmatpush.bf16.msra.mxu0 %v539
    %559 = vmatpush.bf16.msra.mxu0 %v538
    %560 = vmatpush.bf16.msra.mxu0 %v537
    %561 = vmatmul.bf16.gmra.mxu0 %v484
    %v562 = vpop.f32.mrf.mxu0
    %v563 = vadd.f32 %v503, %v562
    %v564 = vpop.f32.mrf.mxu0
    %v565 = vadd.f32 %v503, %v564
    %566 = vdwg.mxu0
    %567 = vst [vmem:[#allocation8] sm:$0xff] %v563
    %568 = vst [vmem:[#allocation8 + $0x8] sm:$0xff] %v565
    // Predicated region
    $region34: #{tpu_custom_call.1} parent=1 // pred_check
      _
    $region35: #{tpu_custom_call.1} parent=1 // pred_check_branch
      %570 = sbr.rel (0) target = $region37
    $region36: #{tpu_custom_call.1} parent=1 // pred_region
      %572 = vsyncadd [#allocation4], 0
      %s573 = sshll.u32 [#allocation8], 4
      %s574 = int_to_ptr.vmem [resolvable:$true] %s573
      %s575 = sshll.u32 %s5, 4
      %s576 = int_to_ptr.hbm [resolvable:$true] %s575
      %581 = dma.vmem_to_hbm [thread:$0]  %s574, 256, %s576, [#allocation4], 128, 128, 8
    $region37: #{tpu_custom_call.1} parent=1 // pred_fallthru
      _
    // Predicated region
    $region38: #{tpu_custom_call.1} parent=1 // pred_check
      _
    $region39: #{tpu_custom_call.1} parent=1 // pred_check_branch
      %583 = sbr.rel (0) target = $region41
    $region40: #{tpu_custom_call.1} parent=1 // pred_region
      %585 = dma.done [#allocation4], 256
    $region41: #{tpu_custom_call.1} parent=1 // pred_fallthru
      _
    %586 = vsyncpa [#allocation3], 1
    %587 = vsyncpa [#allocation6], 1
    %588 = vsyncpa [#allocation4], 1

</llo_original>
